<compile_context>
chip_gen: v7x
topology: tpu7x:2x2x1
jax: 0.10.0
libtpu: 0.0.40
codegen_flags: <defaults>
</compile_context>

<pallas_src>
import jax
import jax.numpy as jnp
from jax.experimental import pallas as pl
from jax.experimental.pallas import tpu as pltpu


def _uncertainty_loss_kernel(losses_ref, weights_ref, out_ref):
    # losses_ref, weights_ref: (1, 3) f32 VMEM tiles. out_ref: (1, 1) f32 SMEM.
    losses = losses_ref[...]        # (1, 3)
    weights = weights_ref[...]      # (1, 3)
    # exp(-w_i) * L_i + w_i, summed over the 3 terms (VPU/EUP + XLU reduce).
    terms = jnp.exp(-weights) * losses + weights
    out_ref[0, 0] = jnp.sum(terms)


@jax.jit
def homoscedastic_uncertainty_loss(losses, weights):
    """losses:  (3,) [L_reconstruction, L_distillation, L_feature] (f32).
    weights: (3,) [w_reconstruction, w_distillation, w_feature] (f32)."""
    losses = jnp.asarray(losses, jnp.float32).reshape(1, 3)
    weights = jnp.asarray(weights, jnp.float32).reshape(1, 3)
    out = pl.pallas_call(
        _uncertainty_loss_kernel,
        out_shape=jax.ShapeDtypeStruct((1, 1), jnp.float32),
        in_specs=[
            pl.BlockSpec((1, 3), lambda: (0, 0)),   # block == full array
            pl.BlockSpec((1, 3), lambda: (0, 0)),
        ],
        out_specs=pl.BlockSpec(memory_space=pltpu.MemorySpace.SMEM),
        cost_estimate=pl.CostEstimate(
            flops=9, transcendentals=3, bytes_accessed=28
        ),
    )(losses, weights)
    # () extraction stays inside the jitted graph (no host-side slice op).
    return out[0, 0]


def _reference(losses, weights):
    w_r, w_d, w_f = weights[0], weights[1], weights[2]
    return (jnp.exp(-w_r) * losses[0]
            + jnp.exp(-w_d) * losses[1]
            + jnp.exp(-w_f) * losses[2]
            + w_r + w_d + w_f)


if __name__ == "__main__":
    key = jax.random.PRNGKey(0)
    k_w, k_l = jax.random.split(key)

    # Deterministic parameter init (equivalent of three torch.randn(()) params).
    weights = jax.random.normal(k_w, (3,), dtype=jnp.float32)

    # Scalar example losses packed as a (3,) vector (forward-pass inputs).
    losses = jax.random.uniform(k_l, (3,), dtype=jnp.float32) * 2.0

    out = homoscedastic_uncertainty_loss(losses, weights)
    out = jax.block_until_ready(out)

    ref = _reference(losses, weights)
    assert jnp.allclose(out, ref, rtol=1e-5, atol=1e-5), (out, ref)

    print("KERNEL_OK")
</pallas_src>

<mosaic_0001>
module attributes {stable_mosaic.version = 11 : i64} {
  func.func @_uncertainty_loss_kernel(%arg0: memref<1x3xf32, #tpu.memory_space<vmem>>, %arg1: memref<1x3xf32, #tpu.memory_space<vmem>>, %arg2: memref<1x1xf32, #tpu.memory_space<smem>>) attributes {dimension_semantics = [], scalar_prefetch = 0 : i64, scratch_operands = 0 : i64, tpu.core_type = #tpu.core_type<tc>} {
    %c0 = arith.constant 0 : index
    %c0_0 = arith.constant 0 : index
    %0 = vector.load %arg0[%c0, %c0_0] : memref<1x3xf32, #tpu.memory_space<vmem>>, vector<1x3xf32>
    %c0_1 = arith.constant 0 : index
    %c0_2 = arith.constant 0 : index
    %1 = vector.load %arg1[%c0_1, %c0_2] : memref<1x3xf32, #tpu.memory_space<vmem>>, vector<1x3xf32>
    %cst = arith.constant 0.000000e+00 : f32
    %2 = vector.broadcast %cst : f32 to vector<1x3xf32>
    %3 = arith.subf %2, %1 : vector<1x3xf32>
    %4 = math.exp %3 : vector<1x3xf32>
    %5 = arith.mulf %4, %0 : vector<1x3xf32>
    %6 = arith.addf %5, %1 : vector<1x3xf32>
    %7 = vector.shape_cast %6 : vector<1x3xf32> to vector<1x1x3xf32>
    %cst_3 = arith.constant dense<0.000000e+00> : vector<1xf32>
    %8 = vector.multi_reduction <add>, %7, %cst_3 [1, 2] : vector<1x1x3xf32> to vector<1xf32>
    %9 = vector.shape_cast %8 : vector<1xf32> to vector<1x1x1xf32>
    %10 = vector.extract %9[0, 0, 0] : f32 from vector<1x1x1xf32>
    %c0_4 = arith.constant 0 : index
    %c0_5 = arith.constant 0 : index
    %11 = memref.load %arg2[%c0_4, %c0_5] : memref<1x1xf32, #tpu.memory_space<smem>>
    memref.store %10, %arg2[%c0_4, %c0_5] : memref<1x1xf32, #tpu.memory_space<smem>>
    return
  }
}

</mosaic_0001>

<llo_original>
// kernel: homoscedastic_uncertainty_loss.1
$region0: #{homoscedastic_uncertainty_loss.1}
  #allocation0 [shape = 'u32[]', space=smem, size = 0x4, offset = 0x4, fixed_abs, tag = 'smem constant byte address 0x4 - core index']
  #allocation1 [shape = 'u32[144,128]{1,0:T(1,128)}', space=vmem, size = 0x12000, scoped, tag = 'internal scratch']
  %s0 = inlined_call_operand.vmem [shape: f32[1,3], index: 0, kind: input, shape index: {}]
  %s1 = inlined_call_operand.vmem [shape: f32[1,3], index: 1, kind: input, shape index: {}]
  %s2 = inlined_call_operand.hbm [shape: f32[1,1], index: 2, kind: output, shape index: {}]
  %s3 = sld [smem:[#allocation0]]
  $region18: #{homoscedastic_uncertainty_loss.1} parent=0
    _
  %s5 = ssub.s32 1, %s3
  %s6 = scalar_select 0, %s5, %s3
  $region1: #{homoscedastic_uncertainty_loss.1} parent=0
    #allocation2 [shape = 'u8[512]{0}', space=smem, size = 0x200, scoped, tag = 'output window, operand 0, single buffered']
    #allocation3 [shape = 's32[1]{0}', space=sflag, size = 0x4, scoped, tag = 'scoped memory for homoscedastic_uncertainty_loss.1']
    %7 = vsyncpa [#allocation3], 0
    // Predicated region
    $region2: #{homoscedastic_uncertainty_loss.1} parent=1 // pred_check
      _
    $region3: #{homoscedastic_uncertainty_loss.1} parent=1 // pred_check_branch
      %9 = sbr.rel (0) target = $region5
    $region4: #{homoscedastic_uncertainty_loss.1} parent=1 // pred_region
      _
    $region5: #{homoscedastic_uncertainty_loss.1} parent=1 // pred_fallthru
      _
    // Predicated region
    $region6: #{homoscedastic_uncertainty_loss.1} parent=1 // pred_check
      _
    $region7: #{homoscedastic_uncertainty_loss.1} parent=1 // pred_check_branch
      %11 = sbr.rel (0) target = $region9
    $region8: #{homoscedastic_uncertainty_loss.1} parent=1 // pred_region
      _
    $region9: #{homoscedastic_uncertainty_loss.1} parent=1 // pred_fallthru
      _
    %v12 = vld [vmem:[%s0] sm:$0x1]
    %v13 = vld [vmem:[%s1] sm:$0x1]
    %v14 = vsub.f32 0.0, %v13
    %v15 = vmul.f32 %v14, 1.442695
    %v16 = vpow.pop %v15
    %v17 = vmul.f32 %v16, %v12
    %v18 = vadd.f32 %v17, %v13
    %vm19 = vcmask 16384
    %v20 = vsel %vm19, %v18, 0.0
    %21 = vadd.xlane.f32.xlu0 %v20
    %v22 = vpop.xlane.xlu0 %21
    %v23 = vrot.slane %v22, 4
    %v24 = vadd.f32 %v22, %v23
    %v25 = vrot.slane %v24, 2
    %v26 = vadd.f32 %v24, %v25
    %v27 = vrot.slane %v26, 1
    %v28 = vadd.f32 %v26, %v27
    %s29 = vtos %v28
    %s30 = scalar_lea.smem [#allocation2], 0
    %31 = sst [smem:[%s30]] %s29
    // Predicated region
    $region10: #{homoscedastic_uncertainty_loss.1} parent=1 // pred_check
      _
    $region11: #{homoscedastic_uncertainty_loss.1} parent=1 // pred_check_branch
      %33 = sbr.rel (0) target = $region13
    $region12: #{homoscedastic_uncertainty_loss.1} parent=1 // pred_region
      %s35 = ssub.s32 16, 16
      %36 = vsyncadd [#allocation3], %s35
      %39 = dma.smem_to_hbm [#allocation2], 16, %s2, [#allocation3]
    $region13: #{homoscedastic_uncertainty_loss.1} parent=1 // pred_fallthru
      _
    // Predicated region
    $region14: #{homoscedastic_uncertainty_loss.1} parent=1 // pred_check
      _
    $region15: #{homoscedastic_uncertainty_loss.1} parent=1 // pred_check_branch
      %41 = sbr.rel (0) target = $region17
    $region16: #{homoscedastic_uncertainty_loss.1} parent=1 // pred_region
      %42 = dma.done [#allocation3], 16
    $region17: #{homoscedastic_uncertainty_loss.1} parent=1 // pred_fallthru
      _
    %43 = sfence
    %44 = vsyncpa [#allocation3], 1

</llo_original>
